<compile_context>
chip_gen: v6e
topology: v6e:2x2x1
jax: 0.10.0
libtpu: 0.0.40
codegen_flags: <defaults>
</compile_context>

<pallas_src>
import functools

import jax
import jax.numpy as jnp
from jax.experimental import pallas as pl
from jax.experimental.pallas import tpu as pltpu

_LANES = 128


def _cdiv(a, b):
    return -(-a // b)


def _ce_kernel(logits_ref, tgt_ref, out_ref, *, hw, tile_rows):
    """One (batch, spatial-tile) grid step.

    logits_ref: (1, C, S, 128)  native-dtype logits tile
    tgt_ref:    (1, S, 128)     int32 target tile
    out_ref:    (1, 1, 128)     lane-dense f32 partial sum
    """
    j = pl.program_id(1)

    x = logits_ref[0].astype(jnp.float32)          # (C, S, 128)
    t = tgt_ref[0]                                  # (S, 128) int32
    c, s, lanes = x.shape

    # Stable logsumexp over the class axis (axis 0): element-wise VPU
    # max/add chains across fully occupied vregs + one EUP exp/log pass.
    m = jnp.max(x, axis=0)                                        # (S, 128)
    lse = m + jnp.log(jnp.sum(jnp.exp(x - m), axis=0))            # (S, 128)

    # Gather the target-class logit via one-hot compare + class-axis sum.
    cls = jax.lax.broadcasted_iota(jnp.int32, (c, s, lanes), 0)
    picked = jnp.sum(jnp.where(cls == t[None], x, 0.0), axis=0)   # (S, 128)

    # Mask positions past the true H*W extent (wrapper zero-padding and/or
    # Pallas edge-block garbage).  Keep this a select -- do NOT turn it into
    # a multiply, or padded-lane NaNs would leak into the sum.
    row = jax.lax.broadcasted_iota(jnp.int32, (s, lanes), 0)
    lane = jax.lax.broadcasted_iota(jnp.int32, (s, lanes), 1)
    pos = (j * tile_rows + row) * lanes + lane
    loss = jnp.where(pos < hw, lse - picked, 0.0)                 # (S, 128)

    # One sublane reduce -> lane-dense (1, 128) partial.  The scalar reduce
    # over all partial blocks happens once in the wrapper.
    out_ref[...] = jnp.sum(loss, axis=0, keepdims=True)[None]


def _vmem_capacity_bytes():
    try:
        info = pltpu.get_tpu_info()
        cap = getattr(info, "vmem_capacity_bytes", None)
        if cap:
            return int(cap)
    except Exception:
        pass
    return 64 * 1024 * 1024  # conservative fallback: v7x per-TensorCore VMEM


def cross_entropy_pallas(logits_nchw, target_nhw, *, max_tile_hw=65536):
    """Sum-reduced cross entropy matching the PyTorch CrossEntropy module."""
    n, c, h, w = logits_nchw.shape
    hw = h * w

    # Free row-major views of the native NCHW layout; pad the spatial axis
    # to a multiple of 128 lanes only if needed (masked inside the kernel).
    logits = logits_nchw.reshape(n, c, hw)
    target = target_nhw.reshape(n, hw).astype(jnp.int32)
    hw_pad = _cdiv(hw, _LANES) * _LANES
    if hw_pad != hw:
        logits = jnp.pad(logits, ((0, 0), (0, 0), (0, hw_pad - hw)))
        target = jnp.pad(target, ((0, 0), (0, hw_pad - hw)))
    rows = hw_pad // _LANES
    logits = logits.reshape(n, c, rows, _LANES)
    target = target.reshape(n, rows, _LANES)

    # --- spatial tile sizing -------------------------------------------------
    # Aggregate accounting: double-buffered logits + target tiles must fit
    # comfortably under the scoped VMEM limit, derived from physical VMEM
    # (64 MiB/TC on v7x -> 48 MiB scoped; 128 MiB on v5e/v6e -> 96 MiB).
    itemsize = logits_nchw.dtype.itemsize
    vmem_limit = min(_vmem_capacity_bytes() * 3 // 4, 96 * 1024 * 1024)
    tile_budget = vmem_limit // 2
    bytes_per_row = _LANES * (c * itemsize + 4)      # logits row + target row
    max_rows = max(1, tile_budget // (2 * bytes_per_row))
    max_rows = min(max_rows, max(1, max_tile_hw // _LANES), rows)

    # Keep >= ~8 grid steps when the input is large enough so both
    # TensorCores get work on v7x (harmless on single-TC v5e/v6e).
    min_steps = 8
    if n * _cdiv(rows, max_rows) < min_steps:
        split_rows = _cdiv(rows, _cdiv(min_steps, n))
        if split_rows >= 8:
            max_rows = min(max_rows, split_rows)

    if max_rows >= rows:
        tile_rows = rows                           # full-extent spatial block
    else:
        tile_rows = max(8, (max_rows // 8) * 8)    # honor (8, 128) tiling rule
    grid_rows = _cdiv(rows, tile_rows)

    # TODO(synk): for vocab-scale C this full-C block can exceed VMEM; add a
    # class-axis grid dimension with an online (running max/sum) logsumexp
    # and pipeline_mode=pl.Buffered(3) on the then-small logits blocks.

    kernel = functools.partial(_ce_kernel, hw=hw, tile_rows=tile_rows)

    partials = pl.pallas_call(
        kernel,
        out_shape=jax.ShapeDtypeStruct((n, 1, grid_rows * _LANES), jnp.float32),
        grid_spec=pltpu.PrefetchScalarGridSpec(
            num_scalar_prefetch=0,
            grid=(n, grid_rows),
            in_specs=[
                pl.BlockSpec((1, c, tile_rows, _LANES),
                             lambda i, j: (i, 0, j, 0)),
                pl.BlockSpec((1, tile_rows, _LANES),
                             lambda i, j: (i, j, 0)),
            ],
            out_specs=pl.BlockSpec((1, 1, _LANES), lambda i, j: (i, 0, j)),
        ),
        compiler_params=pltpu.CompilerParams(
            dimension_semantics=("parallel", "parallel"),
            vmem_limit_bytes=int(vmem_limit),
        ),
    )(logits, target)

    return jnp.sum(partials)


def _reference(logits_nchw, target_nhw):
    n, c, h, w = logits_nchw.shape
    x = jnp.transpose(logits_nchw, (0, 2, 3, 1)).reshape(-1, c).astype(jnp.float32)
    t = target_nhw.reshape(-1)
    logp = jax.nn.log_softmax(x, axis=-1)
    picked = jnp.take_along_axis(logp, t[:, None], axis=1)[:, 0]
    return -jnp.sum(picked)


if __name__ == "__main__":
    key = jax.random.PRNGKey(0)
    k1, k2 = jax.random.split(key)

    N, C, H, W = 2, 4, 16, 16
    logits = jax.random.normal(k1, (N, C, H, W), dtype=jnp.float32)
    target = jax.random.randint(k2, (N, H, W), 0, C, dtype=jnp.int32)

    loss = jax.block_until_ready(cross_entropy_pallas(logits, target))
    ref = jax.block_until_ready(_reference(logits, target))
    assert jnp.allclose(loss, ref, rtol=1e-5, atol=1e-3), (loss, ref)

    print("KERNEL_OK")
</pallas_src>

<mosaic_0001>
module attributes {stable_mosaic.version = 11 : i64} {
  func.func @_ce_kernel(%arg0: i32, %arg1: i32, %arg2: memref<1x4x2x128xf32, #tpu.memory_space<vmem>>, %arg3: memref<1x2x128xi32, #tpu.memory_space<vmem>>, %arg4: memref<1x1x128xf32, #tpu.memory_space<vmem>>) attributes {dimension_semantics = [#tpu.dimension_semantics<parallel>, #tpu.dimension_semantics<parallel>], iteration_bounds = array<i64: 2, 1>, scalar_prefetch = 0 : i64, scratch_operands = 0 : i64, tpu.core_type = #tpu.core_type<tc>, window_params = [{transform_indices = @transform_0, window_bounds = array<i64: 1, 4, 2, 128>}, {transform_indices = @transform_1, window_bounds = array<i64: 1, 2, 128>}, {transform_indices = @transform_2, window_bounds = array<i64: 1, 1, 128>}]} {
    %c0 = arith.constant 0 : index
    %c0_0 = arith.constant 0 : index
    %c0_1 = arith.constant 0 : index
    %c0_2 = arith.constant 0 : index
    %0 = vector.load %arg2[%c0, %c0_0, %c0_1, %c0_2] : memref<1x4x2x128xf32, #tpu.memory_space<vmem>>, vector<1x4x2x128xf32>
    %1 = vector.shape_cast %0 : vector<1x4x2x128xf32> to vector<4x2x128xf32>
    %c0_3 = arith.constant 0 : index
    %c0_4 = arith.constant 0 : index
    %c0_5 = arith.constant 0 : index
    %2 = vector.load %arg3[%c0_3, %c0_4, %c0_5] : memref<1x2x128xi32, #tpu.memory_space<vmem>>, vector<1x2x128xi32>
    %3 = vector.shape_cast %2 : vector<1x2x128xi32> to vector<2x128xi32>
    %cst = arith.constant dense<0xFF800000> : vector<2x128xf32>
    %4 = vector.multi_reduction <maximumf>, %1, %cst [0] : vector<4x2x128xf32> to vector<2x128xf32>
    %5 = vector.shape_cast %4 : vector<2x128xf32> to vector<1x2x128xf32>
    %6 = vector.broadcast %5 : vector<1x2x128xf32> to vector<4x2x128xf32>
    %7 = arith.subf %1, %6 : vector<4x2x128xf32>
    %8 = math.exp %7 : vector<4x2x128xf32>
    %cst_6 = arith.constant dense<0.000000e+00> : vector<2x128xf32>
    %9 = vector.multi_reduction <add>, %8, %cst_6 [0] : vector<4x2x128xf32> to vector<2x128xf32>
    %10 = math.log %9 : vector<2x128xf32>
    %11 = arith.addf %4, %10 : vector<2x128xf32>
    %12 = tpu.iota {dimensions = array<i32: 0>} : vector<4x2x128xi32>
    %13 = vector.shape_cast %3 : vector<2x128xi32> to vector<1x2x128xi32>
    %14 = vector.broadcast %13 : vector<1x2x128xi32> to vector<4x2x128xi32>
    %15 = arith.cmpi eq, %12, %14 : vector<4x2x128xi32>
    %cst_7 = arith.constant 0.000000e+00 : f32
    %16 = vector.broadcast %cst_7 : f32 to vector<4x2x128xf32>
    %17 = arith.select %15, %1, %16 : vector<4x2x128xi1>, vector<4x2x128xf32>
    %cst_8 = arith.constant dense<0.000000e+00> : vector<2x128xf32>
    %18 = vector.multi_reduction <add>, %17, %cst_8 [0] : vector<4x2x128xf32> to vector<2x128xf32>
    %19 = tpu.iota {dimensions = array<i32: 0>} : vector<2x128xi32>
    %20 = tpu.iota {dimensions = array<i32: 1>} : vector<2x128xi32>
    %c2_i32 = arith.constant 2 : i32
    %21 = arith.muli %arg1, %c2_i32 : i32
    %22 = vector.broadcast %21 : i32 to vector<2x128xi32>
    %23 = arith.addi %22, %19 : vector<2x128xi32>
    %c128_i32 = arith.constant 128 : i32
    %24 = vector.broadcast %c128_i32 : i32 to vector<2x128xi32>
    %25 = arith.muli %23, %24 : vector<2x128xi32>
    %26 = arith.addi %25, %20 : vector<2x128xi32>
    %c256_i32 = arith.constant 256 : i32
    %27 = vector.broadcast %c256_i32 : i32 to vector<2x128xi32>
    %28 = arith.cmpi slt, %26, %27 : vector<2x128xi32>
    %29 = arith.subf %11, %18 : vector<2x128xf32>
    %cst_9 = arith.constant 0.000000e+00 : f32
    %30 = vector.broadcast %cst_9 : f32 to vector<2x128xf32>
    %31 = arith.select %28, %29, %30 : vector<2x128xi1>, vector<2x128xf32>
    %cst_10 = arith.constant dense<0.000000e+00> : vector<128xf32>
    %32 = vector.multi_reduction <add>, %31, %cst_10 [0] : vector<2x128xf32> to vector<128xf32>
    %33 = vector.shape_cast %32 : vector<128xf32> to vector<1x128xf32>
    %34 = vector.shape_cast %33 : vector<1x128xf32> to vector<1x1x128xf32>
    %c0_11 = arith.constant 0 : index
    %c0_12 = arith.constant 0 : index
    %c0_13 = arith.constant 0 : index
    %35 = vector.load %arg4[%c0_11, %c0_12, %c0_13] : memref<1x1x128xf32, #tpu.memory_space<vmem>>, vector<1x1x128xf32>
    tpu.vector_store %arg4[%c0_11, %c0_12, %c0_13], %34 {strides = array<i32>} : memref<1x1x128xf32, #tpu.memory_space<vmem>>, vector<1x1x128xf32>,
    return
  }
  func.func @transform_0(%arg0: i32, %arg1: i32) -> (i32, i32, i32, i32) {
    %c0_i32 = arith.constant 0 : i32
    %c0_i32_0 = arith.constant 0 : i32
    %c0_i32_1 = arith.constant 0 : i32
    return %arg0, %c0_i32, %arg1, %c0_i32_0 : i32, i32, i32, i32
  }
  func.func @transform_1(%arg0: i32, %arg1: i32) -> (i32, i32, i32) {
    %c0_i32 = arith.constant 0 : i32
    %c0_i32_0 = arith.constant 0 : i32
    return %arg0, %arg1, %c0_i32 : i32, i32, i32
  }
  func.func @transform_2(%arg0: i32, %arg1: i32) -> (i32, i32, i32) {
    %c0_i32 = arith.constant 0 : i32
    %c0_i32_0 = arith.constant 0 : i32
    return %arg0, %c0_i32, %arg1 : i32, i32, i32
  }
}

</mosaic_0001>

<llo_original>
// kernel: tpu_custom_call.1
$region0: #{tpu_custom_call.1}
  #allocation0 [shape = 'u32[]', space=smem, size = 0x4, offset = 0x4, fixed_abs, tag = 'smem constant byte address 0x4 - core index']
  #allocation1 [shape = 'u32[144,128]{1,0:T(1,128)}', space=vmem, size = 0x12000, scoped, tag = 'internal scratch']
  %s0 = inlined_call_operand.hbm [shape: f32[2,4,2,128], index: 0, kind: input, shape index: {}]
  %s1 = inlined_call_operand.hbm [shape: s32[2,2,128], index: 1, kind: input, shape index: {}]
  %s2 = inlined_call_operand.hbm [shape: f32[2,1,128], index: 2, kind: output, shape index: {}]
  %s3 = sld [smem:[#allocation0]]
  $region49: #{tpu_custom_call.1} parent=0
    _
  %s5 = ssub.s32 1, %s3
  %s6 = scalar_select 0, %s5, %s3
  $region1: #{tpu_custom_call.1} parent=0
    #allocation2 [shape = 'u8[8192]{0}', space=vmem, size = 0x2000, scoped, tag = 'input window, operand 0']
    #allocation3 [shape = 's32[2]{0}', space=sflag, size = 0x8, scoped, tag = 'scoped memory for tpu_custom_call.1']
    #allocation4 [shape = 's32[2]{0}', space=sflag, size = 0x8, scoped, tag = 'scoped memory for tpu_custom_call.1']
    #allocation5 [shape = 'u8[2048]{0}', space=vmem, size = 0x800, scoped, tag = 'input window, operand 1']
    #allocation6 [shape = 's32[2]{0}', space=sflag, size = 0x8, scoped, tag = 'scoped memory for tpu_custom_call.1']
    #allocation7 [shape = 'u8[1024]{0}', space=vmem, size = 0x400, scoped, tag = 'output window, operand 0']
    %7 = vsyncpa [#allocation3], 0
    %s8 = scalar_lea.sflag [#allocation3], 1
    %9 = vsyncpa %s8, 0
    %10 = vsyncpa [#allocation6], 0
    %s11 = scalar_lea.sflag [#allocation6], 1
    %12 = vsyncpa %s11, 0
    %13 = vsyncpa [#allocation4], 0
    %s14 = scalar_lea.sflag [#allocation4], 1
    %15 = vsyncpa %s14, 0
    loop: start=0, step=1, limit=4
    $region2: #{tpu_custom_call.1} parent=1 // loop_pre_header
      _
    $region3: #{tpu_custom_call.1} parent=1 // loop_header
      %s17 = sphi 0, %s21
      %p18 = scmp.ge.s32.totalorder %s17, 4
      %s24 = sphi 0, %s36
      %s25 = sphi 0, %s32
      %s26 = sphi 0, %s24
      %s27 = sphi 0, %s25
      %s28 = sphi 0, %s26
      %s29 = sphi 0, %s27
      %s41 = sphi 0, %s43
      %s44 = sphi 0, %s41
      %s45 = sphi 0, %s44
      %s61 = sphi 0, %s45
      %s69 = sphi 0, %s71
      %s72 = sphi 0, %s69
      %s73 = sphi 0, %s72
      %s89 = sphi 0, %s73
      %s97 = sphi 0, %s99
      %s100 = sphi 0, %s97
      %s101 = sphi 0, %s100
      %s117 = sphi 0, %s101
    $region4: #{tpu_custom_call.1} parent=1 // loop_header_branch
      %20 = sbr.rel (%p18) target = $region8
    $region5: #{tpu_custom_call.1} parent=1 // loop_body
      %s22 = ssub.s32 %s17, 1
      %s23 = ssub.s32 %s17, 2
      %s30 = sadd.s32 1, %s25
      %p31 = scmp.ge.s32.totalorder %s30, 1
      %s32 = scalar_select %p31, 0, %s30
      %s33 = sadd.s32 1, %s24
      %s34 = scalar_select %p31, %s33, %s24
      %p35 = scmp.ge.s32.totalorder %s34, 2
      %s36 = scalar_select %p35, 0, %s34
      %s37 = ssub.s32 %s24, %s36
      %s38 = ssub.s32 %s25, %s32
      %s39 = sor.u32 %s37, %s38
      %p40 = scmp.eq.s32.totalorder %s39, 0
      %s42 = sadd.s32 %s41, 1
      %s43 = scalar_select %p40, %s41, %s42
      %p46 = pneg %p40
      %p47 = scmp.eq.s32.totalorder %s17, 1
      %p48 = por %p46, %p47
      %p49 = scmp.ne.s32.totalorder %s41, %s44
      %p50 = scmp.eq.s32.totalorder %s17, 0
      %p51 = por %p49, %p50
      %p52 = scmp.ne.s32.totalorder %s41, %s44
      %p53 = scmp.eq.s32.totalorder %s22, 1
      %p54 = por %p52, %p53
      %p55 = scmp.ne.s32.totalorder %s44, %s45
      %p56 = scmp.eq.s32.totalorder %s22, 0
      %p57 = por %p55, %p56
      %p58 = scmp.ne.s32.totalorder %s44, %s45
      %p59 = scmp.eq.s32.totalorder %s23, 1
      %p60 = por %p58, %p59
      %p62 = scmp.ne.s32.totalorder %s45, %s61
      %p63 = scmp.eq.s32.totalorder %s23, 0
      %p64 = por %p62, %p63
      %s65 = ssub.s32 %s24, %s36
      %s66 = ssub.s32 %s25, %s32
      %s67 = sor.u32 %s65, %s66
      %p68 = scmp.eq.s32.totalorder %s67, 0
      %s70 = sadd.s32 %s69, 1
      %s71 = scalar_select %p68, %s69, %s70
      %p74 = pneg %p68
      %p75 = scmp.eq.s32.totalorder %s17, 1
      %p76 = por %p74, %p75
      %p77 = scmp.ne.s32.totalorder %s69, %s72
      %p78 = scmp.eq.s32.totalorder %s17, 0
      %p79 = por %p77, %p78
      %p80 = scmp.ne.s32.totalorder %s69, %s72
      %p81 = scmp.eq.s32.totalorder %s22, 1
      %p82 = por %p80, %p81
      %p83 = scmp.ne.s32.totalorder %s72, %s73
      %p84 = scmp.eq.s32.totalorder %s22, 0
      %p85 = por %p83, %p84
      %p86 = scmp.ne.s32.totalorder %s72, %s73
      %p87 = scmp.eq.s32.totalorder %s23, 1
      %p88 = por %p86, %p87
      %p90 = scmp.ne.s32.totalorder %s73, %s89
      %p91 = scmp.eq.s32.totalorder %s23, 0
      %p92 = por %p90, %p91
      %s93 = ssub.s32 %s24, %s36
      %s94 = ssub.s32 %s25, %s32
      %s95 = sor.u32 %s93, %s94
      %p96 = scmp.eq.s32.totalorder %s95, 0
      %s98 = sadd.s32 %s97, 1
      %s99 = scalar_select %p96, %s97, %s98
      %p102 = pneg %p96
      %p103 = scmp.eq.s32.totalorder %s17, 1
      %p104 = por %p102, %p103
      %p105 = scmp.ne.s32.totalorder %s97, %s100
      %p106 = scmp.eq.s32.totalorder %s17, 0
      %p107 = por %p105, %p106
      %p108 = scmp.ne.s32.totalorder %s97, %s100
      %p109 = scmp.eq.s32.totalorder %s22, 1
      %p110 = por %p108, %p109
      %p111 = scmp.ne.s32.totalorder %s100, %s101
      %p112 = scmp.eq.s32.totalorder %s22, 0
      %p113 = por %p111, %p112
      %p114 = scmp.ne.s32.totalorder %s100, %s101
      %p115 = scmp.eq.s32.totalorder %s23, 1
      %p116 = por %p114, %p115
      %p118 = scmp.ne.s32.totalorder %s101, %s117
      %p119 = scmp.eq.s32.totalorder %s23, 0
      %p120 = por %p118, %p119
      %p121 = scmp.le.s32.totalorder 1, %s17
      %p122 = scmp.lt.s32.totalorder %s17, 3
      %p123 = pnand %p121, %p122
      %p124 = pneg %p123
      // Predicated region
      $region9: #{tpu_custom_call.1} parent=5 // pred_check
        _
      $region10: #{tpu_custom_call.1} parent=5 // pred_check_branch
        %126 = sbr.rel (%p123) target = $region12
      $region11: #{tpu_custom_call.1} parent=5 // pred_region
        %s127 = ssub.s32 %s17, 1
      $region12: #{tpu_custom_call.1} parent=5 // pred_fallthru
        _
      %p128 = scmp.lt.s32.totalorder %s17, 2
      // Predicated region
      $region13: #{tpu_custom_call.1} parent=5 // pred_check
        %p129 = pneg %p128
      $region14: #{tpu_custom_call.1} parent=5 // pred_check_branch
        %131 = sbr.rel (%p129) target = $region16
      $region15: #{tpu_custom_call.1} parent=5 // pred_region
        // Predicated region
        $region17: #{tpu_custom_call.1} parent=15 // pred_check
          %p132 = pneg %p51
        $region18: #{tpu_custom_call.1} parent=15 // pred_check_branch
          %134 = sbr.rel (%p132) target = $region20
        $region19: #{tpu_custom_call.1} parent=15 // pred_region
          %s135 = sand.u32 %s41, 1
          %s136 = scalar_lea.sflag [#allocation3], %s135
          %s137 = sand.u32 %s41, 1
          %s138 = smul.addr %s137, 8
          %s139 = scalar_lea.vmem [#allocation2], %s138
          %s141 = ssub.s32 128, 128
          %142 = vsyncadd %s136, %s141
          %s143 = smul.addr %s24, 4
          %s144 = sadd.s32 %s25, %s143
          %s145 = smul.addr %s144, 32
          %s146 = scalar_lea.hbm %s0, %s145
          %s147 = sshll.u32 %s139, 4
          %s148 = int_to_ptr.vmem [resolvable:$true] %s147
          %153 = dma.hbm_to_vmem [thread:$0]  %s146, 128, %s148, %s136, 32, 32, 2
        $region20: #{tpu_custom_call.1} parent=15 // pred_fallthru
          _
        // Predicated region
        $region21: #{tpu_custom_call.1} parent=15 // pred_check
          %p154 = pneg %p79
        $region22: #{tpu_custom_call.1} parent=15 // pred_check_branch
          %156 = sbr.rel (%p154) target = $region24
        $region23: #{tpu_custom_call.1} parent=15 // pred_region
          %s157 = sand.u32 %s69, 1
          %s158 = scalar_lea.sflag [#allocation6], %s157
          %s159 = sand.u32 %s69, 1
          %s160 = smul.addr %s159, 2
          %s161 = scalar_lea.vmem [#allocation5], %s160
          %s163 = ssub.s32 32, 32
          %164 = vsyncadd %s158, %s163
          %s165 = sadd.s32 %s25, %s24
          %s166 = smul.addr %s165, 32
          %s167 = scalar_lea.hbm %s1, %s166
          %s169 = sshll.u32 %s161, 4
          %s170 = int_to_ptr.vmem [resolvable:$true] %s169
          %172 = dma.hbm_to_vmem [thread:$0]  %s167, 32, %s170, %s158
        $region24: #{tpu_custom_call.1} parent=15 // pred_fallthru
          _
      $region16: #{tpu_custom_call.1} parent=5 // pred_fallthru
        _
      %p173 = scmp.le.s32.totalorder 1, %s17
      %p174 = scmp.lt.s32.totalorder %s17, 3
      %p175 = pnand %p173, %p174
      %p176 = pneg %p175
      // Predicated region
      $region25: #{tpu_custom_call.1} parent=5 // pred_check
        _
      $region26: #{tpu_custom_call.1} parent=5 // pred_check_branch
        %178 = sbr.rel (%p175) target = $region28
      $region27: #{tpu_custom_call.1} parent=5 // pred_region
        %s179 = ssub.s32 %s17, 1
        %s180 = sand.u32 %s44, 1
        %s181 = scalar_lea.sflag [#allocation3], %s180
        %s182 = sand.u32 %s44, 1
        %s183 = smul.addr %s182, 8
        %s184 = scalar_lea.vmem [#allocation2], %s183
        // Predicated region
        $region29: #{tpu_custom_call.1} parent=27 // pred_check
          %p185 = pneg %p57
        $region30: #{tpu_custom_call.1} parent=27 // pred_check_branch
          %187 = sbr.rel (%p185) target = $region32
        $region31: #{tpu_custom_call.1} parent=27 // pred_region
          %188 = dma.done %s181, 128
        $region32: #{tpu_custom_call.1} parent=27 // pred_fallthru
          _
        %s189 = sand.u32 %s72, 1
        %s190 = scalar_lea.sflag [#allocation6], %s189
        %s191 = sand.u32 %s72, 1
        %s192 = smul.addr %s191, 2
        %s193 = scalar_lea.vmem [#allocation5], %s192
        // Predicated region
        $region33: #{tpu_custom_call.1} parent=27 // pred_check
          %p194 = pneg %p85
        $region34: #{tpu_custom_call.1} parent=27 // pred_check_branch
          %196 = sbr.rel (%p194) target = $region36
        $region35: #{tpu_custom_call.1} parent=27 // pred_region
          %197 = dma.done %s190, 32
        $region36: #{tpu_custom_call.1} parent=27 // pred_fallthru
          _
        %s198 = sand.u32 %s44, 1
        %s199 = scalar_lea.sflag [#allocation3], %s198
        %s200 = sand.u32 %s44, 1
        %s201 = smul.addr %s200, 8
        %s202 = scalar_lea.vmem [#allocation2], %s201
        %p203 = pneg %p57
        %p204 = pneg %p54
        %s205 = sand.u32 %s72, 1
        %s206 = scalar_lea.sflag [#allocation6], %s205
        %s207 = sand.u32 %s72, 1
        %s208 = smul.addr %s207, 2
        %s209 = scalar_lea.vmem [#allocation5], %s208
        %p210 = pneg %p85
        %p211 = pneg %p82
        %p212 = pneg %p113
        %p213 = pneg %p110
        %s214 = sand.u32 %s100, 1
        %s215 = scalar_lea.sflag [#allocation4], %s214
        %s216 = sand.u32 %s100, 1
        %s217 = scalar_lea.vmem [#allocation7], %s216
        %v218 = vld [vmem:[%s184] sm:$0x3]
        %v219 = vld [vmem:[%s184 + $0x2] sm:$0x3]
        %v220 = vld [vmem:[%s184 + $0x4] sm:$0x3]
        %v221 = vld [vmem:[%s184 + $0x6] sm:$0x3]
        %v222 = vld [vmem:[%s193] sm:$0x3]
        %vm223 = vcmask 1041408
        %v224 = vsel %vm223, %v218, -inf
        %v225 = vsel %vm223, %v219, -inf
        %v226 = vsel %vm223, %v220, -inf
        %v227 = vsel %vm223, %v221, -inf
        %v228 = vmax.f32 %v224, %v225
        %v229 = vmax.f32 %v226, %v227
        %v230 = vmax.f32 %v228, %v229
        %v231 = vsub.f32 %v218, %v230
        %v232 = vsub.f32 %v219, %v230
        %v233 = vsub.f32 %v220, %v230
        %v234 = vsub.f32 %v221, %v230
        %v235 = vmul.f32 %v231, 1.442695
        %v236 = vpow.pop %v235
        %v237 = vmul.f32 %v232, 1.442695
        %v238 = vpow.pop %v237
        %v239 = vmul.f32 %v233, 1.442695
        %v240 = vpow.pop %v239
        %v241 = vmul.f32 %v234, 1.442695
        %v242 = vpow.pop %v241
        %v243 = vsel %vm223, %v236, 0.0
        %v244 = vsel %vm223, %v238, 0.0
        %v245 = vadd.f32 %v243, %v244
        %v246 = vsel %vm223, %v240, 0.0
        %v247 = vadd.f32 %v245, %v246
        %v248 = vsel %vm223, %v242, 0.0
        %v249 = vadd.f32 %v247, %v248
        %v250 = vlog2.pop %v249
        %v251 = vmul.f32 %v250, 0.6931472
        %v252 = vadd.f32 %v230, %v251
        %vm253 = vcmp.eq.s32.totalorder %v222, 0
        %vm254 = vcmp.eq.s32.totalorder %v222, 1
        %vm255 = vcmp.eq.s32.totalorder %v222, 2
        %vm256 = vcmp.eq.s32.totalorder %v222, 3
        %v257 = vsel %vm253, %v218, 0.0
        %v258 = vsel %vm254, %v219, 0.0
        %v259 = vsel %vm255, %v220, 0.0
        %v260 = vsel %vm256, %v221, 0.0
        %v261 = vsel %vm223, %v257, 0.0
        %v262 = vsel %vm223, %v258, 0.0
        %v263 = vadd.f32 %v261, %v262
        %v264 = vsel %vm223, %v259, 0.0
        %v265 = vadd.f32 %v263, %v264
        %v266 = vsel %vm223, %v260, 0.0
        %v267 = vadd.f32 %v265, %v266
        %v268 = vlaneseq
        %v269 = vshrl.u32 %v268, 7
        %v270 = vlaneseq
        %v271 = vand.u32 %v270, 127
        %s272 = smul.u32 %s27, 2
        %v273 = vstv %s272
        %v274 = vadd.s32 %v273, %v269
        %v275 = vmul.u32 %v274, 128
        %v276 = vadd.s32 %v275, %v271
        %vm277 = vcmp.lt.s32.totalorder %v276, 256
        %v278 = vsub.f32 %v252, %v267
        %v279 = vsel %vm277, %v278, 0.0
        %v280 = vsel %vm223, %v279, 0.0
        %v281 = vrot.slane %v280, 4
        %v282 = vadd.f32 %v280, %v281
        %v283 = vrot.slane %v282, 2
        %v284 = vadd.f32 %v282, %v283
        %v285 = vrot.slane %v284, 1
        %v286 = vadd.f32 %v284, %v285
        %287 = vst [vmem:[%s217] sm:$0x1] %v286
        %s288 = sand.u32 %s100, 1
        %s289 = scalar_lea.sflag [#allocation4], %s288
        %s290 = sand.u32 %s100, 1
        %s291 = scalar_lea.vmem [#allocation7], %s290
        // Predicated region
        $region37: #{tpu_custom_call.1} parent=27 // pred_check
          %p292 = pneg %p110
        $region38: #{tpu_custom_call.1} parent=27 // pred_check_branch
          %294 = sbr.rel (%p292) target = $region40
        $region39: #{tpu_custom_call.1} parent=27 // pred_region
          %s296 = ssub.s32 16, 16
          %297 = vsyncadd %s289, %s296
          %s298 = sadd.s32 %s27, %s26
          %s299 = smul.addr %s298, 16
          %s300 = scalar_lea.hbm %s2, %s299
          %s302 = sshll.u32 %s291, 4
          %s303 = int_to_ptr.vmem [resolvable:$true] %s302
          %305 = dma.vmem_to_hbm [thread:$0]  %s303, 16, %s300, %s289
        $region40: #{tpu_custom_call.1} parent=27 // pred_fallthru
          _
      $region28: #{tpu_custom_call.1} parent=5 // pred_fallthru
        _
      %p306 = scmp.le.s32.totalorder 2, %s17
      // Predicated region
      $region41: #{tpu_custom_call.1} parent=5 // pred_check
        %p307 = pneg %p306
      $region42: #{tpu_custom_call.1} parent=5 // pred_check_branch
        %309 = sbr.rel (%p307) target = $region44
      $region43: #{tpu_custom_call.1} parent=5 // pred_region
        %s310 = ssub.s32 %s17, 2
        // Predicated region
        $region45: #{tpu_custom_call.1} parent=43 // pred_check
          %p311 = pneg %p116
        $region46: #{tpu_custom_call.1} parent=43 // pred_check_branch
          %313 = sbr.rel (%p311) target = $region48
        $region47: #{tpu_custom_call.1} parent=43 // pred_region
          %s314 = sand.u32 %s101, 1
          %s315 = scalar_lea.sflag [#allocation4], %s314
          %s316 = sand.u32 %s101, 1
          %s317 = scalar_lea.vmem [#allocation7], %s316
          %318 = dma.done %s315, 16
        $region48: #{tpu_custom_call.1} parent=43 // pred_fallthru
          _
      $region44: #{tpu_custom_call.1} parent=5 // pred_fallthru
        _
    $region6: #{tpu_custom_call.1} parent=1 // loop_footer
      %s21 = sadd.s32 1, %s17
    $region7: #{tpu_custom_call.1} parent=1 // loop_footer_branch
      %16 = sbr.rel target = $region3
    $region8: #{tpu_custom_call.1} parent=1 // loop_exit
      _
    %319 = vsyncpa [#allocation3], 1
    %s320 = scalar_lea.sflag [#allocation3], 1
    %321 = vsyncpa %s320, 1
    %322 = vsyncpa [#allocation6], 1
    %s323 = scalar_lea.sflag [#allocation6], 1
    %324 = vsyncpa %s323, 1
    %325 = vsyncpa [#allocation4], 1
    %s326 = scalar_lea.sflag [#allocation4], 1
    %327 = vsyncpa %s326, 1

</llo_original>
